<compile_context>
chip_gen: v7x
topology: tpu7x:2x2x1
jax: 0.10.0
libtpu: 0.0.40
codegen_flags: <defaults>
</compile_context>

<pallas_src>
import functools

import jax
import jax.numpy as jnp
from jax.experimental import pallas as pl
from jax.experimental.pallas import tpu as pltpu

_LANE = 128       # output / accumulator minor dim (vreg lanes)
_ACC_ROWS = 64    # accumulator rows: (64, 128) f32 = 8 vregs -> stays in registers


def _accumulate_block(o_ref, t_ref, out_ref, *, eps2, block_rows, rows_total,
                      step, masked):
    """Add sum-over-this-block of sqrt((t-o)^2 + eps^2) into the (64,128) output."""
    num_chunks = block_rows // _ACC_ROWS

    def body(c, carry):
        r0 = pl.multiple_of(c * _ACC_ROWS, _ACC_ROWS)
        # Stream at native dtype width; cast to f32 in-register.
        o_c = o_ref[pl.ds(r0, _ACC_ROWS), :].astype(jnp.float32)
        t_c = t_ref[pl.ds(r0, _ACC_ROWS), :].astype(jnp.float32)
        d = t_c - o_c
        v = jnp.sqrt(d * d + jnp.float32(eps2))
        if masked:
            # Row-index based mask (int32-safe: rows_total = numel // 128).
            row = (step * block_rows + r0
                   + jax.lax.broadcasted_iota(jnp.int32, v.shape, 0))
            v = jnp.where(row < rows_total, v, jnp.float32(0.0))
        return carry + v

    part = jax.lax.fori_loop(
        0, num_chunks, body,
        jnp.zeros((_ACC_ROWS, _LANE), jnp.float32),
        unroll=min(4, num_chunks))
    out_ref[...] += part


def _charbonnier_partial_kernel(o_ref, t_ref, out_ref, *, eps2, rows_total,
                                block_rows, mask_last):
    step = pl.program_id(0)
    last = pl.num_programs(0) - 1

    @pl.when(step == 0)
    def _():
        out_ref[...] = jnp.zeros_like(out_ref)

    acc = functools.partial(
        _accumulate_block, o_ref, t_ref, out_ref,
        eps2=eps2, block_rows=block_rows, rows_total=rows_total, step=step)

    if mask_last:
        # Only the final block can extend past the true row count.
        @pl.when(step != last)
        def _():
            acc(masked=False)

        @pl.when(step == last)
        def _():
            acc(masked=True)
    else:
        acc(masked=False)


def charbonnier_loss(output, target, epsilon=1e-3, *, block_rows=8192):
    assert output.shape == target.shape
    n = output.size
    eps2 = float(epsilon) ** 2

    o_flat = output.reshape(-1)
    t_flat = target.reshape(-1)

    rows_total = n // _LANE
    n_main = rows_total * _LANE
    rem = n - n_main

    partial = jnp.float32(0.0)
    if rows_total > 0:
        # Lane-dense (rows, 128) slab of the 128-aligned prefix.  Free reshape
        # when numel % 128 == 0; a single prefix copy otherwise (tail handled
        # below in the wrapper, so no full jnp.pad pass).
        o2d = o_flat[:n_main].reshape(rows_total, _LANE)
        t2d = t_flat[:n_main].reshape(rows_total, _LANE)

        # block_rows: multiple of _ACC_ROWS (64) -> valid sublane tiling for
        # f32 (8) / bf16 (16) / 8-bit (32); clamp so tiny inputs get one block.
        rows_up = -(-rows_total // _ACC_ROWS) * _ACC_ROWS
        block_rows = max(_ACC_ROWS,
                         min(-(-block_rows // _ACC_ROWS) * _ACC_ROWS, rows_up))

        grid_steps = pl.cdiv(rows_total, block_rows)
        mask_last = (grid_steps * block_rows) != rows_total

        kernel = functools.partial(
            _charbonnier_partial_kernel,
            eps2=eps2, rows_total=rows_total,
            block_rows=block_rows, mask_last=mask_last)

        bytes_in = n_main * (o2d.dtype.itemsize + t2d.dtype.itemsize)
        cost = pl.CostEstimate(
            flops=5 * n_main,
            transcendentals=n_main,
            bytes_accessed=bytes_in + _ACC_ROWS * _LANE * 4)

        acc_out = pl.pallas_call(
            kernel,
            out_shape=jax.ShapeDtypeStruct((_ACC_ROWS, _LANE), jnp.float32),
            grid_spec=pltpu.PrefetchScalarGridSpec(
                num_scalar_prefetch=0,
                grid=(grid_steps,),
                in_specs=[
                    pl.BlockSpec((block_rows, _LANE), lambda i: (i, 0)),
                    pl.BlockSpec((block_rows, _LANE), lambda i: (i, 0)),
                ],
                out_specs=pl.BlockSpec((_ACC_ROWS, _LANE), lambda i: (0, 0)),
            ),
            compiler_params=pltpu.CompilerParams(
                dimension_semantics=("arbitrary",),
                vmem_limit_bytes=40 << 20,
            ),
            cost_estimate=cost,
        )(o2d, t2d)

        partial = jnp.sum(acc_out)

    if rem:
        # <=127-element ragged tail: plain jnp in the wrapper (effectively free).
        d = (t_flat[n_main:].astype(jnp.float32)
             - o_flat[n_main:].astype(jnp.float32))
        partial = partial + jnp.sum(jnp.sqrt(d * d + jnp.float32(eps2)))

    return partial / jnp.float32(n)


def charbonnier_loss_ref(output, target, epsilon=1e-3):
    diff = target.astype(jnp.float32) - output.astype(jnp.float32)
    return jnp.mean(jnp.sqrt(diff * diff + jnp.float32(epsilon) ** 2))


if __name__ == "__main__":
    key = jax.random.PRNGKey(0)
    k1, k2 = jax.random.split(key)

    # Primary case: NCHW, same convention as the PyTorch module's inputs.
    shape = (2, 4, 16, 16)
    output = jax.random.normal(k1, shape, dtype=jnp.float32)
    target = jax.random.normal(k2, shape, dtype=jnp.float32)

    loss = charbonnier_loss(output, target, epsilon=1e-3)
    loss = jax.block_until_ready(loss)
    ref = charbonnier_loss_ref(output, target, epsilon=1e-3)
    assert jnp.allclose(loss, ref, rtol=1e-5, atol=1e-6), (loss, ref)

    # Ragged case (numel % 128 != 0): exercises the row mask + wrapper tail.
    k3, k4 = jax.random.split(k1)
    o_r = jax.random.normal(k3, (3, 5, 37, 29), dtype=jnp.float32)
    t_r = jax.random.normal(k4, (3, 5, 37, 29), dtype=jnp.float32)
    l_r = jax.block_until_ready(charbonnier_loss(o_r, t_r, epsilon=1e-3))
    assert jnp.allclose(l_r, charbonnier_loss_ref(o_r, t_r, epsilon=1e-3),
                        rtol=1e-5, atol=1e-6)

    # Multi-grid-step case: small block_rows forces several accumulation steps.
    k5, k6 = jax.random.split(k2)
    o_m = jax.random.normal(k5, (2, 3, 64, 128), dtype=jnp.float32)
    t_m = jax.random.normal(k6, (2, 3, 64, 128), dtype=jnp.float32)
    l_m = jax.block_until_ready(
        charbonnier_loss(o_m, t_m, epsilon=1e-3, block_rows=64))
    assert jnp.allclose(l_m, charbonnier_loss_ref(o_m, t_m, epsilon=1e-3),
                        rtol=1e-5, atol=1e-6)

    print("KERNEL_OK")
</pallas_src>

<mosaic_0001>
module attributes {stable_mosaic.version = 11 : i64} {
  func.func @_charbonnier_partial_kernel(%arg0: i32, %arg1: memref<64x128xf32, #tpu.memory_space<vmem>>, %arg2: memref<64x128xf32, #tpu.memory_space<vmem>>, %arg3: memref<64x128xf32, #tpu.memory_space<vmem>>) attributes {dimension_semantics = [#tpu.dimension_semantics<arbitrary>], iteration_bounds = array<i64: 1>, scalar_prefetch = 0 : i64, scratch_operands = 0 : i64, tpu.core_type = #tpu.core_type<tc>, window_params = [{transform_indices = @transform_0, window_bounds = array<i64: 64, 128>}, {transform_indices = @transform_1, window_bounds = array<i64: 64, 128>}, {pipeline_mode = #tpu.pipeline_mode<synchronous>, transform_indices = @transform_2, window_bounds = array<i64: 64, 128>}]} {
    %c0_i32 = arith.constant 0 : i32
    %0 = arith.cmpi eq, %arg0, %c0_i32 : i32
    %1 = arith.extui %0 : i1 to i32
    %c0_i32_0 = arith.constant 0 : i32
    %2 = arith.cmpi ne, %1, %c0_i32_0 : i32
    scf.if %2 {
      %cst = arith.constant 0.000000e+00 : f32
      %9 = vector.broadcast %cst : f32 to vector<64x128xf32>
      %c0 = arith.constant 0 : index
      %c0_5 = arith.constant 0 : index
      %10 = vector.load %arg3[%c0, %c0_5] : memref<64x128xf32, #tpu.memory_space<vmem>>, vector<64x128xf32>
      tpu.vector_store %arg3[%c0, %c0_5], %9 {strides = array<i32>} : memref<64x128xf32, #tpu.memory_space<vmem>>, vector<64x128xf32>,
    } else {
    }
    %c0_i32_1 = arith.constant 0 : i32
    %3 = arith.cmpi ne, %arg0, %c0_i32_1 : i32
    %4 = arith.extui %3 : i1 to i32
    %c0_i32_2 = arith.constant 0 : i32
    %5 = arith.cmpi ne, %4, %c0_i32_2 : i32
    scf.if %5 {
      %cst = arith.constant 0.000000e+00 : f32
      %9 = vector.broadcast %cst : f32 to vector<64x128xf32>
      %c0_i32_5 = arith.constant 0 : i32
      %c64_i32 = arith.constant 64 : i32
      %10 = arith.muli %c0_i32_5, %c64_i32 : i32
      %11 = tpu.assume_multiple %10, 64 : i32
      %12 = arith.index_cast %11 : i32 to index
      %c0 = arith.constant 0 : index
      %13 = vector.load %arg1[%12, %c0] : memref<64x128xf32, #tpu.memory_space<vmem>>, vector<64x128xf32>
      %14 = arith.index_cast %11 : i32 to index
      %c0_6 = arith.constant 0 : index
      %15 = vector.load %arg2[%14, %c0_6] : memref<64x128xf32, #tpu.memory_space<vmem>>, vector<64x128xf32>
      %16 = arith.subf %15, %13 : vector<64x128xf32>
      %17 = arith.mulf %16, %16 : vector<64x128xf32>
      %cst_7 = arith.constant 9.99999997E-7 : f32
      %18 = vector.broadcast %cst_7 : f32 to vector<64x128xf32>
      %19 = arith.addf %17, %18 : vector<64x128xf32>
      %20 = math.sqrt %19 : vector<64x128xf32>
      %21 = arith.addf %9, %20 : vector<64x128xf32>
      %c1_i32 = arith.constant 1 : i32
      %c0_8 = arith.constant 0 : index
      %c0_9 = arith.constant 0 : index
      %22 = vector.load %arg3[%c0_8, %c0_9] : memref<64x128xf32, #tpu.memory_space<vmem>>, vector<64x128xf32>
      %23 = arith.addf %22, %21 : vector<64x128xf32>
      %c0_10 = arith.constant 0 : index
      %c0_11 = arith.constant 0 : index
      %24 = vector.load %arg3[%c0_10, %c0_11] : memref<64x128xf32, #tpu.memory_space<vmem>>, vector<64x128xf32>
      tpu.vector_store %arg3[%c0_10, %c0_11], %23 {strides = array<i32>} : memref<64x128xf32, #tpu.memory_space<vmem>>, vector<64x128xf32>,
    } else {
    }
    %c0_i32_3 = arith.constant 0 : i32
    %6 = arith.cmpi eq, %arg0, %c0_i32_3 : i32
    %7 = arith.extui %6 : i1 to i32
    %c0_i32_4 = arith.constant 0 : i32
    %8 = arith.cmpi ne, %7, %c0_i32_4 : i32
    scf.if %8 {
      %cst = arith.constant 0.000000e+00 : f32
      %9 = vector.broadcast %cst : f32 to vector<64x128xf32>
      %c0_i32_5 = arith.constant 0 : i32
      %c64_i32 = arith.constant 64 : i32
      %10 = arith.muli %c0_i32_5, %c64_i32 : i32
      %11 = tpu.assume_multiple %10, 64 : i32
      %12 = arith.index_cast %11 : i32 to index
      %c0 = arith.constant 0 : index
      %13 = vector.load %arg1[%12, %c0] : memref<64x128xf32, #tpu.memory_space<vmem>>, vector<64x128xf32>
      %14 = arith.index_cast %11 : i32 to index
      %c0_6 = arith.constant 0 : index
      %15 = vector.load %arg2[%14, %c0_6] : memref<64x128xf32, #tpu.memory_space<vmem>>, vector<64x128xf32>
      %16 = arith.subf %15, %13 : vector<64x128xf32>
      %17 = arith.mulf %16, %16 : vector<64x128xf32>
      %cst_7 = arith.constant 9.99999997E-7 : f32
      %18 = vector.broadcast %cst_7 : f32 to vector<64x128xf32>
      %19 = arith.addf %17, %18 : vector<64x128xf32>
      %20 = math.sqrt %19 : vector<64x128xf32>
      %c64_i32_8 = arith.constant 64 : i32
      %21 = arith.muli %arg0, %c64_i32_8 : i32
      %22 = arith.addi %21, %11 : i32
      %23 = tpu.iota {dimensions = array<i32: 0>} : vector<64x128xi32>
      %24 = vector.broadcast %22 : i32 to vector<64x128xi32>
      %25 = arith.addi %24, %23 : vector<64x128xi32>
      %c16_i32 = arith.constant 16 : i32
      %26 = vector.broadcast %c16_i32 : i32 to vector<64x128xi32>
      %27 = arith.cmpi slt, %25, %26 : vector<64x128xi32>
      %cst_9 = arith.constant 0.000000e+00 : f32
      %28 = vector.broadcast %cst_9 : f32 to vector<64x128xf32>
      %29 = arith.select %27, %20, %28 : vector<64x128xi1>, vector<64x128xf32>
      %30 = arith.addf %9, %29 : vector<64x128xf32>
      %c1_i32 = arith.constant 1 : i32
      %c0_10 = arith.constant 0 : index
      %c0_11 = arith.constant 0 : index
      %31 = vector.load %arg3[%c0_10, %c0_11] : memref<64x128xf32, #tpu.memory_space<vmem>>, vector<64x128xf32>
      %32 = arith.addf %31, %30 : vector<64x128xf32>
      %c0_12 = arith.constant 0 : index
      %c0_13 = arith.constant 0 : index
      %33 = vector.load %arg3[%c0_12, %c0_13] : memref<64x128xf32, #tpu.memory_space<vmem>>, vector<64x128xf32>
      tpu.vector_store %arg3[%c0_12, %c0_13], %32 {strides = array<i32>} : memref<64x128xf32, #tpu.memory_space<vmem>>, vector<64x128xf32>,
    } else {
    }
    return
  }
  func.func @transform_0(%arg0: i32) -> (i32, i32) {
    %c0_i32 = arith.constant 0 : i32
    %c0_i32_0 = arith.constant 0 : i32
    return %arg0, %c0_i32 : i32, i32
  }
  func.func @transform_1(%arg0: i32) -> (i32, i32) {
    %c0_i32 = arith.constant 0 : i32
    %c0_i32_0 = arith.constant 0 : i32
    return %arg0, %c0_i32 : i32, i32
  }
  func.func @transform_2(%arg0: i32) -> (i32, i32) {
    %c0_i32 = arith.constant 0 : i32
    %c0_i32_0 = arith.constant 0 : i32
    %c0_i32_1 = arith.constant 0 : i32
    return %c0_i32, %c0_i32_0 : i32, i32
  }
}

</mosaic_0001>

<llo_original>
// kernel: tpu_custom_call.1
$region0: #{tpu_custom_call.1}
  #allocation0 [shape = 'u32[]', space=smem, size = 0x4, offset = 0x4, fixed_abs, tag = 'smem constant byte address 0x4 - core index']
  #allocation1 [shape = 'u32[144,128]{1,0:T(1,128)}', space=vmem, size = 0x12000, scoped, tag = 'internal scratch']
  %s0 = inlined_call_operand.hbm [shape: f32[16,128], index: 0, kind: input, shape index: {}]
  %s1 = inlined_call_operand.hbm [shape: f32[16,128], index: 1, kind: input, shape index: {}]
  %s2 = inlined_call_operand.hbm [shape: f32[64,128], index: 2, kind: output, shape index: {}]
  %s3 = sld [smem:[#allocation0]]
  $region38: #{tpu_custom_call.1} parent=0
    _
  %s5 = ssub.s32 1, %s3
  %s6 = scalar_select 0, %s5, %s3
  $region1: #{tpu_custom_call.1} parent=0
    #allocation2 [shape = 'u8[32768]{0}', space=vmem, size = 0x8000, scoped, tag = 'input window, operand 0, single buffered']
    #allocation3 [shape = 's32[1]{0}', space=sflag, size = 0x4, scoped, tag = 'scoped memory for tpu_custom_call.1']
    #allocation4 [shape = 's32[1]{0}', space=sflag, size = 0x4, scoped, tag = 'scoped memory for tpu_custom_call.1']
    #allocation5 [shape = 'u8[32768]{0}', space=vmem, size = 0x8000, scoped, tag = 'input window, operand 1, single buffered']
    #allocation6 [shape = 's32[1]{0}', space=sflag, size = 0x4, scoped, tag = 'scoped memory for tpu_custom_call.1']
    #allocation7 [shape = 'u8[32768]{0}', space=vmem, size = 0x8000, scoped, tag = 'output window, operand 0, single buffered']
    %7 = vsyncpa [#allocation3], 0
    %8 = vsyncpa [#allocation6], 0
    %9 = vsyncpa [#allocation4], 0
    // Predicated region
    $region2: #{tpu_custom_call.1} parent=1 // pred_check
      _
    $region3: #{tpu_custom_call.1} parent=1 // pred_check_branch
      %11 = sbr.rel (0) target = $region5
    $region4: #{tpu_custom_call.1} parent=1 // pred_region
      %s13 = ssub.s32 1024, 256
      %14 = vsyncadd [#allocation3], %s13
      %s15 = sshll.u32 [#allocation2], 4
      %s16 = int_to_ptr.vmem [resolvable:$true] %s15
      %21 = dma.hbm_to_vmem [thread:$0]  %s0, 256, %s16, [#allocation3], 128, 128, 8
    $region5: #{tpu_custom_call.1} parent=1 // pred_fallthru
      _
    // Predicated region
    $region6: #{tpu_custom_call.1} parent=1 // pred_check
      _
    $region7: #{tpu_custom_call.1} parent=1 // pred_check_branch
      %23 = sbr.rel (0) target = $region9
    $region8: #{tpu_custom_call.1} parent=1 // pred_region
      %s25 = ssub.s32 1024, 256
      %26 = vsyncadd [#allocation6], %s25
      %s27 = sshll.u32 [#allocation5], 4
      %s28 = int_to_ptr.vmem [resolvable:$true] %s27
      %33 = dma.hbm_to_vmem [thread:$0]  %s1, 256, %s28, [#allocation6], 128, 128, 8
    $region9: #{tpu_custom_call.1} parent=1 // pred_fallthru
      _
    // Predicated region
    $region10: #{tpu_custom_call.1} parent=1 // pred_check
      _
    $region11: #{tpu_custom_call.1} parent=1 // pred_check_branch
      %35 = sbr.rel (0) target = $region13
    $region12: #{tpu_custom_call.1} parent=1 // pred_region
      %36 = dma.done [#allocation3], 1024
    $region13: #{tpu_custom_call.1} parent=1 // pred_fallthru
      _
    // Predicated region
    $region14: #{tpu_custom_call.1} parent=1 // pred_check
      _
    $region15: #{tpu_custom_call.1} parent=1 // pred_check_branch
      %38 = sbr.rel (0) target = $region17
    $region16: #{tpu_custom_call.1} parent=1 // pred_region
      %39 = dma.done [#allocation6], 1024
    $region17: #{tpu_custom_call.1} parent=1 // pred_fallthru
      _
    %p40 = scmp.eq.s32.totalorder 0, 0
    // Predicated region
    $region18: #{tpu_custom_call.1} parent=1 // pred_check
      %p41 = pneg %p40
    $region19: #{tpu_custom_call.1} parent=1 // pred_check_branch
      %43 = sbr.rel (%p41) target = $region21
    $region20: #{tpu_custom_call.1} parent=1 // pred_region
      %44 = vst [vmem:[#allocation7] sm:$0xff] 0.0
      %45 = vst [vmem:[#allocation7 + $0x8] sm:$0xff] 0.0
      %46 = vst [vmem:[#allocation7 + $0x10] sm:$0xff] 0.0
      %47 = vst [vmem:[#allocation7 + $0x18] sm:$0xff] 0.0
      %48 = vst [vmem:[#allocation7 + $0x20] sm:$0xff] 0.0
      %49 = vst [vmem:[#allocation7 + $0x28] sm:$0xff] 0.0
      %50 = vst [vmem:[#allocation7 + $0x30] sm:$0xff] 0.0
      %51 = vst [vmem:[#allocation7 + $0x38] sm:$0xff] 0.0
    $region21: #{tpu_custom_call.1} parent=1 // pred_fallthru
      _
    %p52 = scmp.ne.s32.totalorder 0, 0
    // Predicated region
    $region22: #{tpu_custom_call.1} parent=1 // pred_check
      %p53 = pneg %p52
    $region23: #{tpu_custom_call.1} parent=1 // pred_check_branch
      %55 = sbr.rel (%p53) target = $region25
    $region24: #{tpu_custom_call.1} parent=1 // pred_region
      %v56 = vld [vmem:[#allocation2] sm:$0xff]
      %v57 = vld [vmem:[#allocation2 + $0x8] sm:$0xff]
      %v58 = vld [vmem:[#allocation2 + $0x10] sm:$0xff]
      %v59 = vld [vmem:[#allocation2 + $0x18] sm:$0xff]
      %v60 = vld [vmem:[#allocation2 + $0x20] sm:$0xff]
      %v61 = vld [vmem:[#allocation2 + $0x28] sm:$0xff]
      %v62 = vld [vmem:[#allocation2 + $0x30] sm:$0xff]
      %v63 = vld [vmem:[#allocation2 + $0x38] sm:$0xff]
      %v64 = vld [vmem:[#allocation5] sm:$0xff]
      %v65 = vld [vmem:[#allocation5 + $0x8] sm:$0xff]
      %v66 = vld [vmem:[#allocation5 + $0x10] sm:$0xff]
      %v67 = vld [vmem:[#allocation5 + $0x18] sm:$0xff]
      %v68 = vld [vmem:[#allocation5 + $0x20] sm:$0xff]
      %v69 = vld [vmem:[#allocation5 + $0x28] sm:$0xff]
      %v70 = vld [vmem:[#allocation5 + $0x30] sm:$0xff]
      %v71 = vld [vmem:[#allocation5 + $0x38] sm:$0xff]
      %v72 = vsub.f32 %v64, %v56
      %v73 = vsub.f32 %v65, %v57
      %v74 = vsub.f32 %v66, %v58
      %v75 = vsub.f32 %v67, %v59
      %v76 = vsub.f32 %v68, %v60
      %v77 = vsub.f32 %v69, %v61
      %v78 = vsub.f32 %v70, %v62
      %v79 = vsub.f32 %v71, %v63
      %v80 = vmul.f32 %v72, %v72
      %v81 = vmul.f32 %v73, %v73
      %v82 = vmul.f32 %v74, %v74
      %v83 = vmul.f32 %v75, %v75
      %v84 = vmul.f32 %v76, %v76
      %v85 = vmul.f32 %v77, %v77
      %v86 = vmul.f32 %v78, %v78
      %v87 = vmul.f32 %v79, %v79
      %v88 = vadd.f32 %v80, 1e-06
      %v89 = vadd.f32 %v81, 1e-06
      %v90 = vadd.f32 %v82, 1e-06
      %v91 = vadd.f32 %v83, 1e-06
      %v92 = vadd.f32 %v84, 1e-06
      %v93 = vadd.f32 %v85, 1e-06
      %v94 = vadd.f32 %v86, 1e-06
      %v95 = vadd.f32 %v87, 1e-06
      %v96 = vrsqrt.pop %v88
      %v97 = vmul.f32 %v88, %v96
      %vm98 = vcmp.eq.f32.partialorder %v88, inf
      %v99 = vsel %vm98, %v88, %v97
      %vm100 = vcmp.eq.f32.partialorder %v88, 0.0
      %v101 = vand.u32 %v88, 2147483648
      %v102 = vsel %vm100, %v101, %v99
      %v103 = vrsqrt.pop %v89
      %v104 = vmul.f32 %v89, %v103
      %vm105 = vcmp.eq.f32.partialorder %v89, inf
      %v106 = vsel %vm105, %v89, %v104
      %vm107 = vcmp.eq.f32.partialorder %v89, 0.0
      %v108 = vand.u32 %v89, 2147483648
      %v109 = vsel %vm107, %v108, %v106
      %v110 = vrsqrt.pop %v90
      %v111 = vmul.f32 %v90, %v110
      %vm112 = vcmp.eq.f32.partialorder %v90, inf
      %v113 = vsel %vm112, %v90, %v111
      %vm114 = vcmp.eq.f32.partialorder %v90, 0.0
      %v115 = vand.u32 %v90, 2147483648
      %v116 = vsel %vm114, %v115, %v113
      %v117 = vrsqrt.pop %v91
      %v118 = vmul.f32 %v91, %v117
      %vm119 = vcmp.eq.f32.partialorder %v91, inf
      %v120 = vsel %vm119, %v91, %v118
      %vm121 = vcmp.eq.f32.partialorder %v91, 0.0
      %v122 = vand.u32 %v91, 2147483648
      %v123 = vsel %vm121, %v122, %v120
      %v124 = vrsqrt.pop %v92
      %v125 = vmul.f32 %v92, %v124
      %vm126 = vcmp.eq.f32.partialorder %v92, inf
      %v127 = vsel %vm126, %v92, %v125
      %vm128 = vcmp.eq.f32.partialorder %v92, 0.0
      %v129 = vand.u32 %v92, 2147483648
      %v130 = vsel %vm128, %v129, %v127
      %v131 = vrsqrt.pop %v93
      %v132 = vmul.f32 %v93, %v131
      %vm133 = vcmp.eq.f32.partialorder %v93, inf
      %v134 = vsel %vm133, %v93, %v132
      %vm135 = vcmp.eq.f32.partialorder %v93, 0.0
      %v136 = vand.u32 %v93, 2147483648
      %v137 = vsel %vm135, %v136, %v134
      %v138 = vrsqrt.pop %v94
      %v139 = vmul.f32 %v94, %v138
      %vm140 = vcmp.eq.f32.partialorder %v94, inf
      %v141 = vsel %vm140, %v94, %v139
      %vm142 = vcmp.eq.f32.partialorder %v94, 0.0
      %v143 = vand.u32 %v94, 2147483648
      %v144 = vsel %vm142, %v143, %v141
      %v145 = vrsqrt.pop %v95
      %v146 = vmul.f32 %v95, %v145
      %vm147 = vcmp.eq.f32.partialorder %v95, inf
      %v148 = vsel %vm147, %v95, %v146
      %vm149 = vcmp.eq.f32.partialorder %v95, 0.0
      %v150 = vand.u32 %v95, 2147483648
      %v151 = vsel %vm149, %v150, %v148
      %v152 = vadd.f32 %v102, 0.0
      %v153 = vadd.f32 %v109, 0.0
      %v154 = vadd.f32 %v116, 0.0
      %v155 = vadd.f32 %v123, 0.0
      %v156 = vadd.f32 %v130, 0.0
      %v157 = vadd.f32 %v137, 0.0
      %v158 = vadd.f32 %v144, 0.0
      %v159 = vadd.f32 %v151, 0.0
      %v160 = vld [vmem:[#allocation7] sm:$0xff]
      %v161 = vld [vmem:[#allocation7 + $0x8] sm:$0xff]
      %v162 = vld [vmem:[#allocation7 + $0x10] sm:$0xff]
      %v163 = vld [vmem:[#allocation7 + $0x18] sm:$0xff]
      %v164 = vld [vmem:[#allocation7 + $0x20] sm:$0xff]
      %v165 = vld [vmem:[#allocation7 + $0x28] sm:$0xff]
      %v166 = vld [vmem:[#allocation7 + $0x30] sm:$0xff]
      %v167 = vld [vmem:[#allocation7 + $0x38] sm:$0xff]
      %v168 = vadd.f32 %v160, %v152
      %v169 = vadd.f32 %v161, %v153
      %v170 = vadd.f32 %v162, %v154
      %v171 = vadd.f32 %v163, %v155
      %v172 = vadd.f32 %v164, %v156
      %v173 = vadd.f32 %v165, %v157
      %v174 = vadd.f32 %v166, %v158
      %v175 = vadd.f32 %v167, %v159
      %176 = vst [vmem:[#allocation7] sm:$0xff] %v168
      %177 = vst [vmem:[#allocation7 + $0x8] sm:$0xff] %v169
      %178 = vst [vmem:[#allocation7 + $0x10] sm:$0xff] %v170
      %179 = vst [vmem:[#allocation7 + $0x18] sm:$0xff] %v171
      %180 = vst [vmem:[#allocation7 + $0x20] sm:$0xff] %v172
      %181 = vst [vmem:[#allocation7 + $0x28] sm:$0xff] %v173
      %182 = vst [vmem:[#allocation7 + $0x30] sm:$0xff] %v174
      %183 = vst [vmem:[#allocation7 + $0x38] sm:$0xff] %v175
    $region25: #{tpu_custom_call.1} parent=1 // pred_fallthru
      _
    // Predicated region
    $region26: #{tpu_custom_call.1} parent=1 // pred_check
      %p184 = pneg %p40
    $region27: #{tpu_custom_call.1} parent=1 // pred_check_branch
      %186 = sbr.rel (%p184) target = $region29
    $region28: #{tpu_custom_call.1} parent=1 // pred_region
      %v187 = vld [vmem:[#allocation2] sm:$0xff]
      %v188 = vld [vmem:[#allocation2 + $0x8] sm:$0xff]
      %v189 = vld [vmem:[#allocation2 + $0x10] sm:$0xff]
      %v190 = vld [vmem:[#allocation2 + $0x18] sm:$0xff]
      %v191 = vld [vmem:[#allocation2 + $0x20] sm:$0xff]
      %v192 = vld [vmem:[#allocation2 + $0x28] sm:$0xff]
      %v193 = vld [vmem:[#allocation2 + $0x30] sm:$0xff]
      %v194 = vld [vmem:[#allocation2 + $0x38] sm:$0xff]
      %v195 = vld [vmem:[#allocation5] sm:$0xff]
      %v196 = vld [vmem:[#allocation5 + $0x8] sm:$0xff]
      %v197 = vld [vmem:[#allocation5 + $0x10] sm:$0xff]
      %v198 = vld [vmem:[#allocation5 + $0x18] sm:$0xff]
      %v199 = vld [vmem:[#allocation5 + $0x20] sm:$0xff]
      %v200 = vld [vmem:[#allocation5 + $0x28] sm:$0xff]
      %v201 = vld [vmem:[#allocation5 + $0x30] sm:$0xff]
      %v202 = vld [vmem:[#allocation5 + $0x38] sm:$0xff]
      %v203 = vsub.f32 %v195, %v187
      %v204 = vsub.f32 %v196, %v188
      %v205 = vsub.f32 %v197, %v189
      %v206 = vsub.f32 %v198, %v190
      %v207 = vsub.f32 %v199, %v191
      %v208 = vsub.f32 %v200, %v192
      %v209 = vsub.f32 %v201, %v193
      %v210 = vsub.f32 %v202, %v194
      %v211 = vmul.f32 %v203, %v203
      %v212 = vmul.f32 %v204, %v204
      %v213 = vmul.f32 %v205, %v205
      %v214 = vmul.f32 %v206, %v206
      %v215 = vmul.f32 %v207, %v207
      %v216 = vmul.f32 %v208, %v208
      %v217 = vmul.f32 %v209, %v209
      %v218 = vmul.f32 %v210, %v210
      %v219 = vadd.f32 %v211, 1e-06
      %v220 = vadd.f32 %v212, 1e-06
      %v221 = vadd.f32 %v213, 1e-06
      %v222 = vadd.f32 %v214, 1e-06
      %v223 = vadd.f32 %v215, 1e-06
      %v224 = vadd.f32 %v216, 1e-06
      %v225 = vadd.f32 %v217, 1e-06
      %v226 = vadd.f32 %v218, 1e-06
      %v227 = vrsqrt.pop %v219
      %v228 = vmul.f32 %v219, %v227
      %vm229 = vcmp.eq.f32.partialorder %v219, inf
      %v230 = vsel %vm229, %v219, %v228
      %vm231 = vcmp.eq.f32.partialorder %v219, 0.0
      %v232 = vand.u32 %v219, 2147483648
      %v233 = vsel %vm231, %v232, %v230
      %v234 = vrsqrt.pop %v220
      %v235 = vmul.f32 %v220, %v234
      %vm236 = vcmp.eq.f32.partialorder %v220, inf
      %v237 = vsel %vm236, %v220, %v235
      %vm238 = vcmp.eq.f32.partialorder %v220, 0.0
      %v239 = vand.u32 %v220, 2147483648
      %v240 = vsel %vm238, %v239, %v237
      %v241 = vrsqrt.pop %v221
      %v242 = vmul.f32 %v221, %v241
      %vm243 = vcmp.eq.f32.partialorder %v221, inf
      %v244 = vsel %vm243, %v221, %v242
      %vm245 = vcmp.eq.f32.partialorder %v221, 0.0
      %v246 = vand.u32 %v221, 2147483648
      %v247 = vsel %vm245, %v246, %v244
      %v248 = vrsqrt.pop %v222
      %v249 = vmul.f32 %v222, %v248
      %vm250 = vcmp.eq.f32.partialorder %v222, inf
      %v251 = vsel %vm250, %v222, %v249
      %vm252 = vcmp.eq.f32.partialorder %v222, 0.0
      %v253 = vand.u32 %v222, 2147483648
      %v254 = vsel %vm252, %v253, %v251
      %v255 = vrsqrt.pop %v223
      %v256 = vmul.f32 %v223, %v255
      %vm257 = vcmp.eq.f32.partialorder %v223, inf
      %v258 = vsel %vm257, %v223, %v256
      %vm259 = vcmp.eq.f32.partialorder %v223, 0.0
      %v260 = vand.u32 %v223, 2147483648
      %v261 = vsel %vm259, %v260, %v258
      %v262 = vrsqrt.pop %v224
      %v263 = vmul.f32 %v224, %v262
      %vm264 = vcmp.eq.f32.partialorder %v224, inf
      %v265 = vsel %vm264, %v224, %v263
      %vm266 = vcmp.eq.f32.partialorder %v224, 0.0
      %v267 = vand.u32 %v224, 2147483648
      %v268 = vsel %vm266, %v267, %v265
      %v269 = vrsqrt.pop %v225
      %v270 = vmul.f32 %v225, %v269
      %vm271 = vcmp.eq.f32.partialorder %v225, inf
      %v272 = vsel %vm271, %v225, %v270
      %vm273 = vcmp.eq.f32.partialorder %v225, 0.0
      %v274 = vand.u32 %v225, 2147483648
      %v275 = vsel %vm273, %v274, %v272
      %v276 = vrsqrt.pop %v226
      %v277 = vmul.f32 %v226, %v276
      %vm278 = vcmp.eq.f32.partialorder %v226, inf
      %v279 = vsel %vm278, %v226, %v277
      %vm280 = vcmp.eq.f32.partialorder %v226, 0.0
      %v281 = vand.u32 %v226, 2147483648
      %v282 = vsel %vm280, %v281, %v279
      %s283 = smul.u32 0, 64
      %s284 = sadd.s32 %s283, 0
      %v285 = vlaneseq
      %v286 = vshrl.u32 %v285, 7
      %v287 = vadd.s32 %v286, 8
      %v288 = vadd.s32 %v286, 16
      %v289 = vadd.s32 %v286, 24
      %v290 = vadd.s32 %v286, 32
      %v291 = vadd.s32 %v286, 40
      %v292 = vadd.s32 %v286, 48
      %v293 = vadd.s32 %v286, 56
      %v294 = vstv %s284
      %v295 = vadd.s32 %v294, %v286
      %v296 = vadd.s32 %v294, %v287
      %v297 = vadd.s32 %v294, %v288
      %v298 = vadd.s32 %v294, %v289
      %v299 = vadd.s32 %v294, %v290
      %v300 = vadd.s32 %v294, %v291
      %v301 = vadd.s32 %v294, %v292
      %v302 = vadd.s32 %v294, %v293
      %vm303 = vcmp.lt.s32.totalorder %v295, 16
      %vm304 = vcmp.lt.s32.totalorder %v296, 16
      %vm305 = vcmp.lt.s32.totalorder %v297, 16
      %vm306 = vcmp.lt.s32.totalorder %v298, 16
      %vm307 = vcmp.lt.s32.totalorder %v299, 16
      %vm308 = vcmp.lt.s32.totalorder %v300, 16
      %vm309 = vcmp.lt.s32.totalorder %v301, 16
      %vm310 = vcmp.lt.s32.totalorder %v302, 16
      %v311 = vsel %vm303, %v233, 0.0
      %v312 = vsel %vm304, %v240, 0.0
      %v313 = vsel %vm305, %v247, 0.0
      %v314 = vsel %vm306, %v254, 0.0
      %v315 = vsel %vm307, %v261, 0.0
      %v316 = vsel %vm308, %v268, 0.0
      %v317 = vsel %vm309, %v275, 0.0
      %v318 = vsel %vm310, %v282, 0.0
      %v319 = vadd.f32 %v311, 0.0
      %v320 = vadd.f32 %v312, 0.0
      %v321 = vadd.f32 %v313, 0.0
      %v322 = vadd.f32 %v314, 0.0
      %v323 = vadd.f32 %v315, 0.0
      %v324 = vadd.f32 %v316, 0.0
      %v325 = vadd.f32 %v317, 0.0
      %v326 = vadd.f32 %v318, 0.0
      %v327 = vld [vmem:[#allocation7] sm:$0xff]
      %v328 = vld [vmem:[#allocation7 + $0x8] sm:$0xff]
      %v329 = vld [vmem:[#allocation7 + $0x10] sm:$0xff]
      %v330 = vld [vmem:[#allocation7 + $0x18] sm:$0xff]
      %v331 = vld [vmem:[#allocation7 + $0x20] sm:$0xff]
      %v332 = vld [vmem:[#allocation7 + $0x28] sm:$0xff]
      %v333 = vld [vmem:[#allocation7 + $0x30] sm:$0xff]
      %v334 = vld [vmem:[#allocation7 + $0x38] sm:$0xff]
      %v335 = vadd.f32 %v327, %v319
      %v336 = vadd.f32 %v328, %v320
      %v337 = vadd.f32 %v329, %v321
      %v338 = vadd.f32 %v330, %v322
      %v339 = vadd.f32 %v331, %v323
      %v340 = vadd.f32 %v332, %v324
      %v341 = vadd.f32 %v333, %v325
      %v342 = vadd.f32 %v334, %v326
      %343 = vst [vmem:[#allocation7] sm:$0xff] %v335
      %344 = vst [vmem:[#allocation7 + $0x8] sm:$0xff] %v336
      %345 = vst [vmem:[#allocation7 + $0x10] sm:$0xff] %v337
      %346 = vst [vmem:[#allocation7 + $0x18] sm:$0xff] %v338
      %347 = vst [vmem:[#allocation7 + $0x20] sm:$0xff] %v339
      %348 = vst [vmem:[#allocation7 + $0x28] sm:$0xff] %v340
      %349 = vst [vmem:[#allocation7 + $0x30] sm:$0xff] %v341
      %350 = vst [vmem:[#allocation7 + $0x38] sm:$0xff] %v342
    $region29: #{tpu_custom_call.1} parent=1 // pred_fallthru
      _
    // Predicated region
    $region30: #{tpu_custom_call.1} parent=1 // pred_check
      _
    $region31: #{tpu_custom_call.1} parent=1 // pred_check_branch
      %352 = sbr.rel (0) target = $region33
    $region32: #{tpu_custom_call.1} parent=1 // pred_region
      %s354 = ssub.s32 1024, 1024
      %355 = vsyncadd [#allocation4], %s354
      %s356 = sshll.u32 [#allocation7], 4
      %s357 = int_to_ptr.vmem [resolvable:$true] %s356
      %362 = dma.vmem_to_hbm [thread:$0]  %s357, 1024, %s2, [#allocation4], 128, 128, 8
    $region33: #{tpu_custom_call.1} parent=1 // pred_fallthru
      _
    // Predicated region
    $region34: #{tpu_custom_call.1} parent=1 // pred_check
      _
    $region35: #{tpu_custom_call.1} parent=1 // pred_check_branch
      %364 = sbr.rel (0) target = $region37
    $region36: #{tpu_custom_call.1} parent=1 // pred_region
      %365 = dma.done [#allocation4], 1024
    $region37: #{tpu_custom_call.1} parent=1 // pred_fallthru
      _
    %366 = vsyncpa [#allocation3], 1
    %367 = vsyncpa [#allocation6], 1
    %368 = vsyncpa [#allocation4], 1

</llo_original>
